<compile_context>
chip_gen: v7x
topology: tpu7x:2x2x1
jax: 0.10.0
libtpu: 0.0.40
codegen_flags: <defaults>
</compile_context>

<pallas_src>
import functools

import jax
import jax.numpy as jnp
from jax.experimental import pallas as pl
from jax.experimental.pallas import tpu as pltpu


def _cdiv(a, b):
    return -(-a // b)


def _round_up(x, m):
    return _cdiv(x, m) * m


# ---------------------------------------------------------------------------
# Kernels
# ---------------------------------------------------------------------------
def _decoder_kernel_blockdiag(z_ref, adjk_ref, wa_ref, w1t_ref, b1_ref,
                              w2t_ref, b2_ref, slab_ref, *,
                              D, Zin, Nout, lane_pad, negative_slope, fc_dtype):
    """One batch tile per grid step; block-diagonal-aware FC stages.

    z_ref    : (TB, D*Zin)   batch tile, (node, feat) folded on lanes
    adjk_ref : (D*Zin, D*Zin) kron(adj_inv^T, I_Zin)  (f32)
    wa_ref   : (1, D*Zin)     Wa tiled over nodes     (f32)
    w1t_ref  : (Zin, H)       shared per-node W1^T    (f32 or bf16)
    b1_ref   : (1, H)
    w2t_ref  : (H, Nout)      shared per-node W2^T    (f32 or bf16)
    b2_ref   : (1, Nout)
    slab_ref : (TB, W)        [mat_z | out | zero-pad] lane-dense output slab
    """
    f32 = jnp.float32
    tb = z_ref.shape[0]
    wa = wa_ref[...]                                   # (1, D*Zin)
    zaug = z_ref[...] + wa                             # (TB, D*Zin)

    # Stage 1: node mixing (dense over nodes) -- single whole-tile MXU matmul,
    # kept f32 because mat_z is returned (feeds the WGAN loss downstream).
    mat_z = jnp.dot(zaug, adjk_ref[...], preferred_element_type=f32) - wa

    # Stage 2/3: per-node FCs are block-diagonal -> fold nodes into rows (one
    # in-kernel relayout) and use the small shared weights instead of
    # kron(I_D, W^T) (D x fewer weight bytes / MACs).
    x = mat_z.reshape(tb * D, Zin).astype(fc_dtype)    # (TB*D, Zin)
    h = jnp.dot(x, w1t_ref[...], preferred_element_type=f32) + b1_ref[...]
    h = jnp.maximum(h, negative_slope * h)             # leaky_relu / relu
    h = h.astype(fc_dtype)
    o = jnp.dot(h, w2t_ref[...], preferred_element_type=f32) + b2_ref[...]
    out2 = o.reshape(tb, D * Nout)                     # back to lane layout

    parts = [mat_z, out2]
    if lane_pad:
        parts.append(jnp.zeros((tb, lane_pad), f32))
    slab_ref[...] = jnp.concatenate(parts, axis=-1).astype(slab_ref.dtype)


def _decoder_kernel_kronfc(z_ref, adjk_ref, wa_ref, w1k_ref, b1_ref,
                           w2k_ref, b2_ref, matz_ref, out_ref, *,
                           negative_slope, fc_dtype):
    """Conservative fallback: dense kron(I_D, W^T) FC weights, two outputs."""
    f32 = jnp.float32
    wa = wa_ref[...]
    zaug = z_ref[...] + wa
    mat_z = jnp.dot(zaug, adjk_ref[...], preferred_element_type=f32) - wa
    matz_ref[...] = mat_z.astype(matz_ref.dtype)
    h = jnp.dot(mat_z.astype(fc_dtype), w1k_ref[...],
                preferred_element_type=f32) + b1_ref[...]
    h = jnp.maximum(h, negative_slope * h)
    out = jnp.dot(h.astype(fc_dtype), w2k_ref[...],
                  preferred_element_type=f32) + b2_ref[...]
    out_ref[...] = out.astype(out_ref.dtype)


# ---------------------------------------------------------------------------
# Wrapper
# ---------------------------------------------------------------------------
def _const_spec(shape, single_buffer):
    """BlockSpec for a grid-invariant operand (index_map constant)."""
    ndim = len(shape)
    imap = lambda *_: (0,) * ndim
    if single_buffer:
        # Double-buffering an invariant operand is pure VMEM waste.
        return pl.BlockSpec(shape, imap, pipeline_mode=pl.Buffered(1))
    return pl.BlockSpec(shape, imap)


def mlp_decoder_forward(input_z, origin_A, Wa, params, data_type='benchmark',
                        batch_tile=512, fc_weight_dtype=None):
    """Pallas implementation of MLPDecoder.forward.

    input_z : (B, D, Zin) float32
    origin_A: (D, D)      float32
    Wa      : (Zin,)      float32
    params  : dict with 'w1' (H, Zin), 'b1' (H,), 'w2' (Nout, H), 'b2' (Nout,)
              in PyTorch (out_features, in_features) convention.
    batch_tile     : max rows per grid step (sublane-aligned, VMEM-budgeted).
    fc_weight_dtype: optional (e.g. jnp.bfloat16) operand dtype for the FC-stage
                     MXU dots; adjacency stage / mat_z stay f32.
    """
    B, D, Zin = input_z.shape
    H = params['w1'].shape[0]
    Nout = params['w2'].shape[0]
    DZ, DH, DN = D * Zin, D * H, D * Nout
    f32 = jnp.float32
    fc_dtype = jnp.dtype(jnp.float32 if fc_weight_dtype is None else fc_weight_dtype)
    fc_isz = fc_dtype.itemsize

    # preprocess_adj_new1: inv(I - A^T)   (plain-JAX glue, see TODO above)
    adj_inv = jnp.linalg.inv(jnp.eye(D, dtype=f32) - origin_A.T.astype(f32))

    # Only the adjacency stage keeps a Kronecker lift (it mixes nodes); the FC
    # stages use the small shared per-node weights.
    adj_k = jnp.kron(adj_inv.T, jnp.eye(Zin, dtype=f32))        # (DZ, DZ) f32
    wa_row = jnp.tile(Wa.astype(f32), D).reshape(1, DZ)
    w1t = params['w1'].T.astype(f32).astype(fc_dtype)           # (Zin, H)
    b1r = params['b1'].astype(f32).reshape(1, H)
    w2t = params['w2'].T.astype(f32).astype(fc_dtype)           # (H, Nout)
    b2r = params['b2'].astype(f32).reshape(1, Nout)

    negative_slope = 0.01 if data_type == 'benchmark' else 0.0

    # Fused lane-dense output slab: [mat_z | out | pad] padded to 128 lanes.
    W_lanes = _round_up(DZ + DN, 128)
    lane_pad = W_lanes - (DZ + DN)

    # ---- batch tiling (sublane-aligned, VMEM-budgeted) ----------------------
    b8 = _round_up(max(B, 1), 8)
    const_bytes = (DZ * DZ * 4 + 8 * DZ * 4 + Zin * H * fc_isz + 8 * H * 4
                   + H * Nout * fc_isz + 8 * Nout * 4)
    # per-row: double-buffered z in + slab out, plus in-kernel temporaries.
    row_bytes = (2 * DZ * 4 + 2 * W_lanes * 4
                 + (4 * DZ + 3 * D * H + 2 * D * Nout + 2 * W_lanes) * 4)
    budget = 40 << 20                                   # headroom on v7x (64 MiB phys)
    tb_fit = max(8, ((budget - 2 * const_bytes) // max(row_bytes, 1) // 8) * 8)
    tb = max(8, (min(batch_tile, b8) // 8) * 8)
    tb = min(tb, tb_fit)
    if B >= 16:
        # >= 2 tiles so the "parallel" batch axis can shard across both
        # TensorCores on v7x; costs only ~0.35 us/step on single-core chips.
        tb = min(tb, _round_up(_cdiv(b8, 2), 8))
    n_tiles = _cdiv(b8, tb)
    b_pad = n_tiles * tb

    z2d = input_z.astype(f32).reshape(B, DZ)            # free reshape
    if b_pad != B:
        z2d = jnp.pad(z2d, ((0, b_pad - B), (0, 0)))

    need = 2 * const_bytes + tb * row_bytes
    vmem_limit = int(min(max(32 << 20, need + (4 << 20)), 56 << 20))
    cparams = pltpu.CompilerParams(dimension_semantics=("parallel",),
                                   vmem_limit_bytes=vmem_limit)
    cost = pl.CostEstimate(
        flops=2 * b_pad * (DZ * DZ + D * Zin * H + D * H * Nout),
        transcendentals=0,
        bytes_accessed=int(b_pad * (DZ + W_lanes) * 4 + DZ * DZ * 4 + DZ * 4
                           + Zin * H * fc_isz + H * 4 + H * Nout * fc_isz + Nout * 4))

    def _run_blockdiag(single_buffer_consts):
        kern = functools.partial(_decoder_kernel_blockdiag, D=D, Zin=Zin,
                                 Nout=Nout, lane_pad=lane_pad,
                                 negative_slope=negative_slope, fc_dtype=fc_dtype)
        slab = pl.pallas_call(
            kern,
            grid=(n_tiles,),
            in_specs=[
                pl.BlockSpec((tb, DZ), lambda t: (t, 0)),        # z batch tile
                _const_spec((DZ, DZ), single_buffer_consts),     # kron(adj_inv^T, I)
                _const_spec((1, DZ), single_buffer_consts),      # Wa row
                _const_spec((Zin, H), single_buffer_consts),     # W1^T (shared)
                _const_spec((1, H), single_buffer_consts),       # b1
                _const_spec((H, Nout), single_buffer_consts),    # W2^T (shared)
                _const_spec((1, Nout), single_buffer_consts),    # b2
            ],
            out_specs=pl.BlockSpec((tb, W_lanes), lambda t: (t, 0)),
            out_shape=jax.ShapeDtypeStruct((b_pad, W_lanes), f32),
            compiler_params=cparams,
            cost_estimate=cost,
        )(z2d, adj_k, wa_row, w1t, b1r, w2t, b2r)
        return slab[:, :DZ], slab[:, DZ:DZ + DN]

    def _run_kronfc():
        # Last-resort fallback: previous dense-kron-FC layout (always lowers).
        eye_d = jnp.eye(D, dtype=f32)
        w1k = jnp.kron(eye_d, params['w1'].T.astype(f32)).astype(fc_dtype)
        w2k = jnp.kron(eye_d, params['w2'].T.astype(f32)).astype(fc_dtype)
        b1row = jnp.tile(params['b1'].astype(f32), D).reshape(1, DH)
        b2row = jnp.tile(params['b2'].astype(f32), D).reshape(1, DN)
        kern = functools.partial(_decoder_kernel_kronfc,
                                 negative_slope=negative_slope, fc_dtype=fc_dtype)
        return pl.pallas_call(
            kern,
            grid=(n_tiles,),
            in_specs=[
                pl.BlockSpec((tb, DZ), lambda t: (t, 0)),
                pl.BlockSpec((DZ, DZ), lambda t: (0, 0)),
                pl.BlockSpec((1, DZ), lambda t: (0, 0)),
                pl.BlockSpec((DZ, DH), lambda t: (0, 0)),
                pl.BlockSpec((1, DH), lambda t: (0, 0)),
                pl.BlockSpec((DH, DN), lambda t: (0, 0)),
                pl.BlockSpec((1, DN), lambda t: (0, 0)),
            ],
            out_specs=(pl.BlockSpec((tb, DZ), lambda t: (t, 0)),
                       pl.BlockSpec((tb, DN), lambda t: (t, 0))),
            out_shape=(jax.ShapeDtypeStruct((b_pad, DZ), f32),
                       jax.ShapeDtypeStruct((b_pad, DN), f32)),
            compiler_params=cparams,
            cost_estimate=cost,
        )(z2d, adj_k, wa_row, w1k, b1row, w2k, b2row)

    try:
        matz2d, out2d = _run_blockdiag(single_buffer_consts=True)
    except Exception:                       # Buffered(1) unsupported, etc.
        try:
            matz2d, out2d = _run_blockdiag(single_buffer_consts=False)
        except Exception:                   # in-kernel relayout unsupported
            matz2d, out2d = _run_kronfc()

    mat_z = matz2d[:B].reshape(B, D, Zin)
    out = out2d[:B].reshape(B, D, Nout)
    return mat_z, out


# ---------------------------------------------------------------------------
# Parameter init (matches the PyTorch module's init_weights)
# ---------------------------------------------------------------------------
def _xavier_normal(key, out_features, in_features):
    std = (2.0 / (in_features + out_features)) ** 0.5
    return std * jax.random.normal(key, (out_features, in_features), dtype=jnp.float32)


def init_mlp_decoder_params(key, n_in_z, n_out, n_hid):
    k1, k2 = jax.random.split(key)
    return {
        'w1': _xavier_normal(k1, n_hid, n_in_z),   # out_fc1.weight (n_hid, n_in_z)
        'b1': jnp.zeros((n_hid,), jnp.float32),    # out_fc1.bias   = 0
        'w2': _xavier_normal(k2, n_out, n_hid),    # out_fc2.weight (n_out, n_hid)
        'b2': jnp.zeros((n_out,), jnp.float32),    # out_fc2.bias   = 0
    }


if __name__ == "__main__":
    # Small shapes consistent with the module: B=2 samples, D=8 graph nodes,
    # n_in_z=4 latent dims, n_hid=32, n_out=4.
    B, D, n_in_z, n_hid, n_out = 2, 8, 4, 32, 4

    key = jax.random.PRNGKey(0)
    k_params, k_z, k_a, k_wa = jax.random.split(key, 4)

    params = init_mlp_decoder_params(k_params, n_in_z, n_out, n_hid)
    input_z = jax.random.normal(k_z, (B, D, n_in_z), dtype=jnp.float32)
    origin_A = 0.1 * jax.random.normal(k_a, (D, D), dtype=jnp.float32)
    Wa = 0.1 * jax.random.normal(k_wa, (n_in_z,), dtype=jnp.float32)

    def reference(zb):
        adj_inv = jnp.linalg.inv(jnp.eye(D, dtype=jnp.float32) - origin_A.T)
        matz = jnp.einsum('ij,bjk->bik', adj_inv, zb + Wa) - Wa
        h = matz @ params['w1'].T + params['b1']
        h = jnp.where(h > 0, h, 0.01 * h)
        return matz, h @ params['w2'].T + params['b2']

    # 1) f32 path, whole batch in one tile.
    mat_z, out = mlp_decoder_forward(input_z, origin_A, Wa, params,
                                     data_type='benchmark')
    jax.block_until_ready((mat_z, out))
    mz_ref, o_ref = reference(input_z)
    assert mat_z.shape == (B, D, n_in_z) and out.shape == (B, D, n_out)
    assert jnp.allclose(mat_z, mz_ref, atol=5e-5, rtol=5e-5)
    assert jnp.allclose(out, o_ref, atol=5e-5, rtol=5e-5)

    # 2) Multi-tile + batch-padding path (batch not a multiple of the tile).
    B2 = 50
    z2 = jax.random.normal(jax.random.PRNGKey(1), (B2, D, n_in_z), dtype=jnp.float32)
    mz2, o2 = mlp_decoder_forward(z2, origin_A, Wa, params,
                                  data_type='benchmark', batch_tile=16)
    jax.block_until_ready((mz2, o2))
    mz2_ref, o2_ref = reference(z2)
    assert jnp.allclose(mz2, mz2_ref, atol=5e-5, rtol=5e-5)
    assert jnp.allclose(o2, o2_ref, atol=5e-5, rtol=5e-5)

    # 3) bf16 FC-weight path: mat_z stays exact f32 (adj stage f32); out is
    #    checked at bf16-appropriate tolerance.
    mz3, o3 = mlp_decoder_forward(input_z, origin_A, Wa, params,
                                  fc_weight_dtype=jnp.bfloat16)
    jax.block_until_ready((mz3, o3))
    assert jnp.allclose(mz3, mz_ref, atol=5e-5, rtol=5e-5)
    assert jnp.allclose(o3, o_ref, atol=1e-1, rtol=1e-1)

    print("KERNEL_OK")
</pallas_src>

<mosaic_0001>
module attributes {stable_mosaic.version = 11 : i64} {
  func.func @_decoder_kernel_blockdiag(%arg0: i32, %arg1: memref<8x32xf32, #tpu.memory_space<vmem>>, %arg2: memref<32x32xf32, #tpu.memory_space<vmem>>, %arg3: memref<1x32xf32, #tpu.memory_space<vmem>>, %arg4: memref<4x32xf32, #tpu.memory_space<vmem>>, %arg5: memref<1x32xf32, #tpu.memory_space<vmem>>, %arg6: memref<32x4xf32, #tpu.memory_space<vmem>>, %arg7: memref<1x4xf32, #tpu.memory_space<vmem>>, %arg8: memref<8x128xf32, #tpu.memory_space<vmem>>) attributes {dimension_semantics = [#tpu.dimension_semantics<parallel>], iteration_bounds = array<i64: 1>, scalar_prefetch = 0 : i64, scratch_operands = 0 : i64, tpu.core_type = #tpu.core_type<tc>, window_params = [{transform_indices = @transform_0, window_bounds = array<i64: 8, 32>}, {pipeline_mode = #tpu.pipeline_mode<synchronous>, transform_indices = @transform_1, window_bounds = array<i64: 32, 32>}, {pipeline_mode = #tpu.pipeline_mode<synchronous>, transform_indices = @transform_2, window_bounds = array<i64: 1, 32>}, {pipeline_mode = #tpu.pipeline_mode<synchronous>, transform_indices = @transform_3, window_bounds = array<i64: 4, 32>}, {pipeline_mode = #tpu.pipeline_mode<synchronous>, transform_indices = @transform_4, window_bounds = array<i64: 1, 32>}, {pipeline_mode = #tpu.pipeline_mode<synchronous>, transform_indices = @transform_5, window_bounds = array<i64: 32, 4>}, {pipeline_mode = #tpu.pipeline_mode<synchronous>, transform_indices = @transform_6, window_bounds = array<i64: 1, 4>}, {transform_indices = @transform_7, window_bounds = array<i64: 8, 128>}]} {
    %c0 = arith.constant 0 : index
    %c0_0 = arith.constant 0 : index
    %0 = vector.load %arg3[%c0, %c0_0] : memref<1x32xf32, #tpu.memory_space<vmem>>, vector<1x32xf32>
    %c0_1 = arith.constant 0 : index
    %c0_2 = arith.constant 0 : index
    %1 = vector.load %arg1[%c0_1, %c0_2] : memref<8x32xf32, #tpu.memory_space<vmem>>, vector<8x32xf32>
    %2 = vector.broadcast %0 : vector<1x32xf32> to vector<8x32xf32>
    %3 = arith.addf %1, %2 : vector<8x32xf32>
    %c0_3 = arith.constant 0 : index
    %c0_4 = arith.constant 0 : index
    %4 = vector.load %arg2[%c0_3, %c0_4] : memref<32x32xf32, #tpu.memory_space<vmem>>, vector<32x32xf32>
    %cst = arith.constant dense<0.000000e+00> : vector<8x32xf32>
    %5 = tpu.matmul %3, %4, %cst {dimension_numbers = #tpu.dot_dimension_numbers<[1], [0], [0], [1], [0, 0, 1, 1], [], []>} : vector<8x32xf32>, vector<32x32xf32>, vector<8x32xf32> -> vector<8x32xf32>
    %6 = vector.broadcast %0 : vector<1x32xf32> to vector<8x32xf32>
    %7 = arith.subf %5, %6 : vector<8x32xf32>
    %8 = vector.shape_cast %7 : vector<8x32xf32> to vector<64x4xf32>
    %c0_5 = arith.constant 0 : index
    %c0_6 = arith.constant 0 : index
    %9 = vector.load %arg4[%c0_5, %c0_6] : memref<4x32xf32, #tpu.memory_space<vmem>>, vector<4x32xf32>
    %cst_7 = arith.constant dense<0.000000e+00> : vector<64x32xf32>
    %10 = tpu.matmul %8, %9, %cst_7 {dimension_numbers = #tpu.dot_dimension_numbers<[1], [0], [0], [1], [0, 0, 1, 1], [], []>} : vector<64x4xf32>, vector<4x32xf32>, vector<64x32xf32> -> vector<64x32xf32>
    %c0_8 = arith.constant 0 : index
    %c0_9 = arith.constant 0 : index
    %11 = vector.load %arg5[%c0_8, %c0_9] : memref<1x32xf32, #tpu.memory_space<vmem>>, vector<1x32xf32>
    %12 = vector.broadcast %11 : vector<1x32xf32> to vector<64x32xf32>
    %13 = arith.addf %10, %12 : vector<64x32xf32>
    %cst_10 = arith.constant 0.00999999977 : f32
    %14 = vector.broadcast %cst_10 : f32 to vector<64x32xf32>
    %15 = arith.mulf %14, %13 : vector<64x32xf32>
    %16 = arith.maximumf %13, %15 : vector<64x32xf32>
    %c0_11 = arith.constant 0 : index
    %c0_12 = arith.constant 0 : index
    %17 = vector.load %arg6[%c0_11, %c0_12] : memref<32x4xf32, #tpu.memory_space<vmem>>, vector<32x4xf32>
    %cst_13 = arith.constant dense<0.000000e+00> : vector<64x4xf32>
    %18 = tpu.matmul %16, %17, %cst_13 {dimension_numbers = #tpu.dot_dimension_numbers<[1], [0], [0], [1], [0, 0, 1, 1], [], []>} : vector<64x32xf32>, vector<32x4xf32>, vector<64x4xf32> -> vector<64x4xf32>
    %c0_14 = arith.constant 0 : index
    %c0_15 = arith.constant 0 : index
    %19 = vector.load %arg7[%c0_14, %c0_15] : memref<1x4xf32, #tpu.memory_space<vmem>>, vector<1x4xf32>
    %20 = vector.broadcast %19 : vector<1x4xf32> to vector<64x4xf32>
    %21 = arith.addf %18, %20 : vector<64x4xf32>
    %22 = vector.shape_cast %21 : vector<64x4xf32> to vector<8x32xf32>
    %cst_16 = arith.constant 0.000000e+00 : f32
    %23 = vector.broadcast %cst_16 : f32 to vector<8x64xf32>
    %24 = tpu.concatenate %7, %22, %23 in 1 : vector<8x32xf32>, vector<8x32xf32>, vector<8x64xf32> -> vector<8x128xf32>
    %c0_17 = arith.constant 0 : index
    %c0_18 = arith.constant 0 : index
    %25 = vector.load %arg8[%c0_17, %c0_18] : memref<8x128xf32, #tpu.memory_space<vmem>>, vector<8x128xf32>
    tpu.vector_store %arg8[%c0_17, %c0_18], %24 {strides = array<i32>} : memref<8x128xf32, #tpu.memory_space<vmem>>, vector<8x128xf32>,
    return
  }
  func.func @transform_0(%arg0: i32) -> (i32, i32) {
    %c0_i32 = arith.constant 0 : i32
    %c0_i32_0 = arith.constant 0 : i32
    return %arg0, %c0_i32 : i32, i32
  }
  func.func @transform_1(%arg0: i32) -> (i32, i32) {
    %c0_i32 = arith.constant 0 : i32
    %c0_i32_0 = arith.constant 0 : i32
    %c0_i32_1 = arith.constant 0 : i32
    return %c0_i32, %c0_i32_0 : i32, i32
  }
  func.func @transform_2(%arg0: i32) -> (i32, i32) {
    %c0_i32 = arith.constant 0 : i32
    %c0_i32_0 = arith.constant 0 : i32
    %c0_i32_1 = arith.constant 0 : i32
    return %c0_i32, %c0_i32_0 : i32, i32
  }
  func.func @transform_3(%arg0: i32) -> (i32, i32) {
    %c0_i32 = arith.constant 0 : i32
    %c0_i32_0 = arith.constant 0 : i32
    %c0_i32_1 = arith.constant 0 : i32
    return %c0_i32, %c0_i32_0 : i32, i32
  }
  func.func @transform_4(%arg0: i32) -> (i32, i32) {
    %c0_i32 = arith.constant 0 : i32
    %c0_i32_0 = arith.constant 0 : i32
    %c0_i32_1 = arith.constant 0 : i32
    return %c0_i32, %c0_i32_0 : i32, i32
  }
  func.func @transform_5(%arg0: i32) -> (i32, i32) {
    %c0_i32 = arith.constant 0 : i32
    %c0_i32_0 = arith.constant 0 : i32
    %c0_i32_1 = arith.constant 0 : i32
    return %c0_i32, %c0_i32_0 : i32, i32
  }
  func.func @transform_6(%arg0: i32) -> (i32, i32) {
    %c0_i32 = arith.constant 0 : i32
    %c0_i32_0 = arith.constant 0 : i32
    %c0_i32_1 = arith.constant 0 : i32
    return %c0_i32, %c0_i32_0 : i32, i32
  }
  func.func @transform_7(%arg0: i32) -> (i32, i32) {
    %c0_i32 = arith.constant 0 : i32
    %c0_i32_0 = arith.constant 0 : i32
    return %arg0, %c0_i32 : i32, i32
  }
}

module attributes {stable_mosaic.version = 11 : i64} {
  func.func @_decoder_kernel_blockdiag(%arg0: i32, %arg1: memref<8x32xf32, #tpu.memory_space<vmem>>, %arg2: memref<32x32xf32, #tpu.memory_space<vmem>>, %arg3: memref<1x32xf32, #tpu.memory_space<vmem>>, %arg4: memref<4x32xf32, #tpu.memory_space<vmem>>, %arg5: memref<1x32xf32, #tpu.memory_space<vmem>>, %arg6: memref<32x4xf32, #tpu.memory_space<vmem>>, %arg7: memref<1x4xf32, #tpu.memory_space<vmem>>, %arg8: memref<8x128xf32, #tpu.memory_space<vmem>>) attributes {dimension_semantics = [#tpu.dimension_semantics<parallel>], iteration_bounds = array<i64: 1>, scalar_prefetch = 0 : i64, scratch_operands = 0 : i64, tpu.core_type = #tpu.core_type<tc>, window_params = [{transform_indices = @transform_0, window_bounds = array<i64: 8, 32>}, {pipeline_mode = #tpu.pipeline_mode<synchronous>, transform_indices = @transform_1, window_bounds = array<i64: 32, 32>}, {pipeline_mode = #tpu.pipeline_mode<synchronous>, transform_indices = @transform_2, window_bounds = array<i64: 1, 32>}, {pipeline_mode = #tpu.pipeline_mode<synchronous>, transform_indices = @transform_3, window_bounds = array<i64: 4, 32>}, {pipeline_mode = #tpu.pipeline_mode<synchronous>, transform_indices = @transform_4, window_bounds = array<i64: 1, 32>}, {pipeline_mode = #tpu.pipeline_mode<synchronous>, transform_indices = @transform_5, window_bounds = array<i64: 32, 4>}, {pipeline_mode = #tpu.pipeline_mode<synchronous>, transform_indices = @transform_6, window_bounds = array<i64: 1, 4>}, {transform_indices = @transform_7, window_bounds = array<i64: 8, 128>}]} {
    %c0 = arith.constant 0 : index
    %c0_0 = arith.constant 0 : index
    %0 = vector.load %arg3[%c0, %c0_0] : memref<1x32xf32, #tpu.memory_space<vmem>>, vector<1x32xf32>
    %c0_1 = arith.constant 0 : index
    %c0_2 = arith.constant 0 : index
    %1 = vector.load %arg1[%c0_1, %c0_2] : memref<8x32xf32, #tpu.memory_space<vmem>>, vector<8x32xf32>
    %2 = vector.broadcast %0 : vector<1x32xf32> to vector<8x32xf32>
    %3 = arith.addf %1, %2 : vector<8x32xf32>
    %c0_3 = arith.constant 0 : index
    %c0_4 = arith.constant 0 : index
    %4 = vector.load %arg2[%c0_3, %c0_4] : memref<32x32xf32, #tpu.memory_space<vmem>>, vector<32x32xf32>
    %cst = arith.constant dense<0.000000e+00> : vector<8x32xf32>
    %5 = tpu.matmul %3, %4, %cst {dimension_numbers = #tpu.dot_dimension_numbers<[1], [0], [0], [1], [0, 0, 1, 1], [], []>} : vector<8x32xf32>, vector<32x32xf32>, vector<8x32xf32> -> vector<8x32xf32>
    %6 = vector.broadcast %0 : vector<1x32xf32> to vector<8x32xf32>
    %7 = arith.subf %5, %6 : vector<8x32xf32>
    %8 = vector.shape_cast %7 : vector<8x32xf32> to vector<64x4xf32>
    %c0_5 = arith.constant 0 : index
    %c0_6 = arith.constant 0 : index
    %9 = vector.load %arg4[%c0_5, %c0_6] : memref<4x32xf32, #tpu.memory_space<vmem>>, vector<4x32xf32>
    %cst_7 = arith.constant dense<0.000000e+00> : vector<64x32xf32>
    %10 = tpu.matmul %8, %9, %cst_7 {dimension_numbers = #tpu.dot_dimension_numbers<[1], [0], [0], [1], [0, 0, 1, 1], [], []>} : vector<64x4xf32>, vector<4x32xf32>, vector<64x32xf32> -> vector<64x32xf32>
    %c0_8 = arith.constant 0 : index
    %c0_9 = arith.constant 0 : index
    %11 = vector.load %arg5[%c0_8, %c0_9] : memref<1x32xf32, #tpu.memory_space<vmem>>, vector<1x32xf32>
    %12 = vector.broadcast %11 : vector<1x32xf32> to vector<64x32xf32>
    %13 = arith.addf %10, %12 : vector<64x32xf32>
    %cst_10 = arith.constant 0.00999999977 : f32
    %14 = vector.broadcast %cst_10 : f32 to vector<64x32xf32>
    %15 = arith.mulf %14, %13 : vector<64x32xf32>
    %16 = arith.maximumf %13, %15 : vector<64x32xf32>
    %c0_11 = arith.constant 0 : index
    %c0_12 = arith.constant 0 : index
    %17 = vector.load %arg6[%c0_11, %c0_12] : memref<32x4xf32, #tpu.memory_space<vmem>>, vector<32x4xf32>
    %cst_13 = arith.constant dense<0.000000e+00> : vector<64x4xf32>
    %18 = tpu.matmul %16, %17, %cst_13 {dimension_numbers = #tpu.dot_dimension_numbers<[1], [0], [0], [1], [0, 0, 1, 1], [], []>} : vector<64x32xf32>, vector<32x4xf32>, vector<64x4xf32> -> vector<64x4xf32>
    %c0_14 = arith.constant 0 : index
    %c0_15 = arith.constant 0 : index
    %19 = vector.load %arg7[%c0_14, %c0_15] : memref<1x4xf32, #tpu.memory_space<vmem>>, vector<1x4xf32>
    %20 = vector.broadcast %19 : vector<1x4xf32> to vector<64x4xf32>
    %21 = arith.addf %18, %20 : vector<64x4xf32>
    %22 = vector.shape_cast %21 : vector<64x4xf32> to vector<8x32xf32>
    %cst_16 = arith.constant 0.000000e+00 : f32
    %23 = vector.broadcast %cst_16 : f32 to vector<8x64xf32>
    %24 = tpu.concatenate %7, %22, %23 in 1 : vector<8x32xf32>, vector<8x32xf32>, vector<8x64xf32> -> vector<8x128xf32>
    %c0_17 = arith.constant 0 : index
    %c0_18 = arith.constant 0 : index
    %25 = vector.load %arg8[%c0_17, %c0_18] : memref<8x128xf32, #tpu.memory_space<vmem>>, vector<8x128xf32>
    tpu.vector_store %arg8[%c0_17, %c0_18], %24 {strides = array<i32>} : memref<8x128xf32, #tpu.memory_space<vmem>>, vector<8x128xf32>,
    return
  }
  func.func @transform_0(%arg0: i32) -> (i32, i32) {
    %c0_i32 = arith.constant 0 : i32
    %c0_i32_0 = arith.constant 0 : i32
    return %arg0, %c0_i32 : i32, i32
  }
  func.func @transform_1(%arg0: i32) -> (i32, i32) {
    %c0_i32 = arith.constant 0 : i32
    %c0_i32_0 = arith.constant 0 : i32
    %c0_i32_1 = arith.constant 0 : i32
    return %c0_i32, %c0_i32_0 : i32, i32
  }
  func.func @transform_2(%arg0: i32) -> (i32, i32) {
    %c0_i32 = arith.constant 0 : i32
    %c0_i32_0 = arith.constant 0 : i32
    %c0_i32_1 = arith.constant 0 : i32
    return %c0_i32, %c0_i32_0 : i32, i32
  }
  func.func @transform_3(%arg0: i32) -> (i32, i32) {
    %c0_i32 = arith.constant 0 : i32
    %c0_i32_0 = arith.constant 0 : i32
    %c0_i32_1 = arith.constant 0 : i32
    return %c0_i32, %c0_i32_0 : i32, i32
  }
  func.func @transform_4(%arg0: i32) -> (i32, i32) {
    %c0_i32 = arith.constant 0 : i32
    %c0_i32_0 = arith.constant 0 : i32
    %c0_i32_1 = arith.constant 0 : i32
    return %c0_i32, %c0_i32_0 : i32, i32
  }
  func.func @transform_5(%arg0: i32) -> (i32, i32) {
    %c0_i32 = arith.constant 0 : i32
    %c0_i32_0 = arith.constant 0 : i32
    %c0_i32_1 = arith.constant 0 : i32
    return %c0_i32, %c0_i32_0 : i32, i32
  }
  func.func @transform_6(%arg0: i32) -> (i32, i32) {
    %c0_i32 = arith.constant 0 : i32
    %c0_i32_0 = arith.constant 0 : i32
    %c0_i32_1 = arith.constant 0 : i32
    return %c0_i32, %c0_i32_0 : i32, i32
  }
  func.func @transform_7(%arg0: i32) -> (i32, i32) {
    %c0_i32 = arith.constant 0 : i32
    %c0_i32_0 = arith.constant 0 : i32
    return %arg0, %c0_i32 : i32, i32
  }
}

module attributes {stable_mosaic.version = 11 : i64} {
  func.func @_decoder_kernel_kronfc(%arg0: i32, %arg1: memref<8x32xf32, #tpu.memory_space<vmem>>, %arg2: memref<32x32xf32, #tpu.memory_space<vmem>>, %arg3: memref<1x32xf32, #tpu.memory_space<vmem>>, %arg4: memref<32x256xf32, #tpu.memory_space<vmem>>, %arg5: memref<1x256xf32, #tpu.memory_space<vmem>>, %arg6: memref<256x32xf32, #tpu.memory_space<vmem>>, %arg7: memref<1x32xf32, #tpu.memory_space<vmem>>, %arg8: memref<8x32xf32, #tpu.memory_space<vmem>>, %arg9: memref<8x32xf32, #tpu.memory_space<vmem>>) attributes {dimension_semantics = [#tpu.dimension_semantics<parallel>], iteration_bounds = array<i64: 1>, scalar_prefetch = 0 : i64, scratch_operands = 0 : i64, tpu.core_type = #tpu.core_type<tc>, window_params = [{transform_indices = @transform_0, window_bounds = array<i64: 8, 32>}, {pipeline_mode = #tpu.pipeline_mode<synchronous>, transform_indices = @transform_1, window_bounds = array<i64: 32, 32>}, {pipeline_mode = #tpu.pipeline_mode<synchronous>, transform_indices = @transform_2, window_bounds = array<i64: 1, 32>}, {pipeline_mode = #tpu.pipeline_mode<synchronous>, transform_indices = @transform_3, window_bounds = array<i64: 32, 256>}, {pipeline_mode = #tpu.pipeline_mode<synchronous>, transform_indices = @transform_4, window_bounds = array<i64: 1, 256>}, {pipeline_mode = #tpu.pipeline_mode<synchronous>, transform_indices = @transform_5, window_bounds = array<i64: 256, 32>}, {pipeline_mode = #tpu.pipeline_mode<synchronous>, transform_indices = @transform_6, window_bounds = array<i64: 1, 32>}, {transform_indices = @transform_7, window_bounds = array<i64: 8, 32>}, {transform_indices = @transform_8, window_bounds = array<i64: 8, 32>}]} {
    %c0 = arith.constant 0 : index
    %c0_0 = arith.constant 0 : index
    %0 = vector.load %arg3[%c0, %c0_0] : memref<1x32xf32, #tpu.memory_space<vmem>>, vector<1x32xf32>
    %c0_1 = arith.constant 0 : index
    %c0_2 = arith.constant 0 : index
    %1 = vector.load %arg1[%c0_1, %c0_2] : memref<8x32xf32, #tpu.memory_space<vmem>>, vector<8x32xf32>
    %2 = vector.broadcast %0 : vector<1x32xf32> to vector<8x32xf32>
    %3 = arith.addf %1, %2 : vector<8x32xf32>
    %c0_3 = arith.constant 0 : index
    %c0_4 = arith.constant 0 : index
    %4 = vector.load %arg2[%c0_3, %c0_4] : memref<32x32xf32, #tpu.memory_space<vmem>>, vector<32x32xf32>
    %cst = arith.constant dense<0.000000e+00> : vector<8x32xf32>
    %5 = tpu.matmul %3, %4, %cst {dimension_numbers = #tpu.dot_dimension_numbers<[1], [0], [0], [1], [0, 0, 1, 1], [], []>} : vector<8x32xf32>, vector<32x32xf32>, vector<8x32xf32> -> vector<8x32xf32>
    %6 = vector.broadcast %0 : vector<1x32xf32> to vector<8x32xf32>
    %7 = arith.subf %5, %6 : vector<8x32xf32>
    %c0_5 = arith.constant 0 : index
    %c0_6 = arith.constant 0 : index
    %8 = vector.load %arg8[%c0_5, %c0_6] : memref<8x32xf32, #tpu.memory_space<vmem>>, vector<8x32xf32>
    tpu.vector_store %arg8[%c0_5, %c0_6], %7 {strides = array<i32>} : memref<8x32xf32, #tpu.memory_space<vmem>>, vector<8x32xf32>,
    %c0_7 = arith.constant 0 : index
    %c0_8 = arith.constant 0 : index
    %9 = vector.load %arg4[%c0_7, %c0_8] : memref<32x256xf32, #tpu.memory_space<vmem>>, vector<32x256xf32>
    %cst_9 = arith.constant dense<0.000000e+00> : vector<8x256xf32>
    %10 = tpu.matmul %7, %9, %cst_9 {dimension_numbers = #tpu.dot_dimension_numbers<[1], [0], [0], [1], [0, 0, 1, 1], [], []>} : vector<8x32xf32>, vector<32x256xf32>, vector<8x256xf32> -> vector<8x256xf32>
    %c0_10 = arith.constant 0 : index
    %c0_11 = arith.constant 0 : index
    %11 = vector.load %arg5[%c0_10, %c0_11] : memref<1x256xf32, #tpu.memory_space<vmem>>, vector<1x256xf32>
    %12 = vector.broadcast %11 : vector<1x256xf32> to vector<8x256xf32>
    %13 = arith.addf %10, %12 : vector<8x256xf32>
    %cst_12 = arith.constant 0.00999999977 : f32
    %14 = vector.broadcast %cst_12 : f32 to vector<8x256xf32>
    %15 = arith.mulf %14, %13 : vector<8x256xf32>
    %16 = arith.maximumf %13, %15 : vector<8x256xf32>
    %c0_13 = arith.constant 0 : index
    %c0_14 = arith.constant 0 : index
    %17 = vector.load %arg6[%c0_13, %c0_14] : memref<256x32xf32, #tpu.memory_space<vmem>>, vector<256x32xf32>
    %cst_15 = arith.constant dense<0.000000e+00> : vector<8x32xf32>
    %18 = tpu.matmul %16, %17, %cst_15 {dimension_numbers = #tpu.dot_dimension_numbers<[1], [0], [0], [1], [0, 0, 1, 1], [], []>} : vector<8x256xf32>, vector<256x32xf32>, vector<8x32xf32> -> vector<8x32xf32>
    %c0_16 = arith.constant 0 : index
    %c0_17 = arith.constant 0 : index
    %19 = vector.load %arg7[%c0_16, %c0_17] : memref<1x32xf32, #tpu.memory_space<vmem>>, vector<1x32xf32>
    %20 = vector.broadcast %19 : vector<1x32xf32> to vector<8x32xf32>
    %21 = arith.addf %18, %20 : vector<8x32xf32>
    %c0_18 = arith.constant 0 : index
    %c0_19 = arith.constant 0 : index
    %22 = vector.load %arg9[%c0_18, %c0_19] : memref<8x32xf32, #tpu.memory_space<vmem>>, vector<8x32xf32>
    tpu.vector_store %arg9[%c0_18, %c0_19], %21 {strides = array<i32>} : memref<8x32xf32, #tpu.memory_space<vmem>>, vector<8x32xf32>,
    return
  }
  func.func @transform_0(%arg0: i32) -> (i32, i32) {
    %c0_i32 = arith.constant 0 : i32
    %c0_i32_0 = arith.constant 0 : i32
    return %arg0, %c0_i32 : i32, i32
  }
  func.func @transform_1(%arg0: i32) -> (i32, i32) {
    %c0_i32 = arith.constant 0 : i32
    %c0_i32_0 = arith.constant 0 : i32
    %c0_i32_1 = arith.constant 0 : i32
    return %c0_i32, %c0_i32_0 : i32, i32
  }
  func.func @transform_2(%arg0: i32) -> (i32, i32) {
    %c0_i32 = arith.constant 0 : i32
    %c0_i32_0 = arith.constant 0 : i32
    %c0_i32_1 = arith.constant 0 : i32
    return %c0_i32, %c0_i32_0 : i32, i32
  }
  func.func @transform_3(%arg0: i32) -> (i32, i32) {
    %c0_i32 = arith.constant 0 : i32
    %c0_i32_0 = arith.constant 0 : i32
    %c0_i32_1 = arith.constant 0 : i32
    return %c0_i32, %c0_i32_0 : i32, i32
  }
  func.func @transform_4(%arg0: i32) -> (i32, i32) {
    %c0_i32 = arith.constant 0 : i32
    %c0_i32_0 = arith.constant 0 : i32
    %c0_i32_1 = arith.constant 0 : i32
    return %c0_i32, %c0_i32_0 : i32, i32
  }
  func.func @transform_5(%arg0: i32) -> (i32, i32) {
    %c0_i32 = arith.constant 0 : i32
    %c0_i32_0 = arith.constant 0 : i32
    %c0_i32_1 = arith.constant 0 : i32
    return %c0_i32, %c0_i32_0 : i32, i32
  }
  func.func @transform_6(%arg0: i32) -> (i32, i32) {
    %c0_i32 = arith.constant 0 : i32
    %c0_i32_0 = arith.constant 0 : i32
    %c0_i32_1 = arith.constant 0 : i32
    return %c0_i32, %c0_i32_0 : i32, i32
  }
  func.func @transform_7(%arg0: i32) -> (i32, i32) {
    %c0_i32 = arith.constant 0 : i32
    %c0_i32_0 = arith.constant 0 : i32
    return %arg0, %c0_i32 : i32, i32
  }
  func.func @transform_8(%arg0: i32) -> (i32, i32) {
    %c0_i32 = arith.constant 0 : i32
    %c0_i32_0 = arith.constant 0 : i32
    return %arg0, %c0_i32 : i32, i32
  }
}

</mosaic_0001>

<llo_original>
// kernel: tpu_custom_call.1
$region0: #{tpu_custom_call.1}
  #allocation0 [shape = 'u32[]', space=smem, size = 0x4, offset = 0x4, fixed_abs, tag = 'smem constant byte address 0x4 - core index']
  #allocation1 [shape = 'u32[144,128]{1,0:T(1,128)}', space=vmem, size = 0x12000, scoped, tag = 'internal scratch']
  %s0 = inlined_call_operand.vmem [shape: f32[8,32], index: 0, kind: input, shape index: {}]
  %s1 = inlined_call_operand.vmem [shape: f32[32,32], index: 1, kind: input, shape index: {}]
  %s2 = inlined_call_operand.vmem [shape: f32[1,32], index: 2, kind: input, shape index: {}]
  %s3 = inlined_call_operand.vmem [shape: f32[32,256], index: 3, kind: input, shape index: {}]
  %s4 = inlined_call_operand.vmem [shape: f32[1,256], index: 4, kind: input, shape index: {}]
  %s5 = inlined_call_operand.vmem [shape: f32[256,32], index: 5, kind: input, shape index: {}]
  %s6 = inlined_call_operand.vmem [shape: f32[1,32], index: 6, kind: input, shape index: {}]
  %s7 = inlined_call_operand.hbm [shape: f32[8,32], index: 7, kind: output, shape index: {0}]
  %s8 = inlined_call_operand.hbm [shape: f32[8,32], index: 8, kind: output, shape index: {1}]
  %9 = xla_tuple %s7, %s8
  %s10 = sld [smem:[#allocation0]]
  $region46: #{tpu_custom_call.1} parent=0
    _
  %s12 = ssub.s32 1, %s10
  %s13 = scalar_select 0, %s12, %s10
  $region1: #{tpu_custom_call.1} parent=0
    #allocation2 [shape = 'u8[4096]{0}', space=vmem, size = 0x1000, scoped, tag = 'output window, operand 0, single buffered']
    #allocation3 [shape = 's32[1]{0}', space=sflag, size = 0x4, scoped, tag = 'scoped memory for tpu_custom_call.1']
    #allocation4 [shape = 'u8[4096]{0}', space=vmem, size = 0x1000, scoped, tag = 'output window, operand 1, single buffered']
    #allocation5 [shape = 's32[1]{0}', space=sflag, size = 0x4, scoped, tag = 'scoped memory for tpu_custom_call.1']
    %14 = vsyncpa [#allocation3], 0
    %15 = vsyncpa [#allocation5], 0
    // Predicated region
    $region2: #{tpu_custom_call.1} parent=1 // pred_check
      _
    $region3: #{tpu_custom_call.1} parent=1 // pred_check_branch
      %17 = sbr.rel (0) target = $region5
    $region4: #{tpu_custom_call.1} parent=1 // pred_region
      _
    $region5: #{tpu_custom_call.1} parent=1 // pred_fallthru
      _
    // Predicated region
    $region6: #{tpu_custom_call.1} parent=1 // pred_check
      _
    $region7: #{tpu_custom_call.1} parent=1 // pred_check_branch
      %19 = sbr.rel (0) target = $region9
    $region8: #{tpu_custom_call.1} parent=1 // pred_region
      _
    $region9: #{tpu_custom_call.1} parent=1 // pred_fallthru
      _
    // Predicated region
    $region10: #{tpu_custom_call.1} parent=1 // pred_check
      _
    $region11: #{tpu_custom_call.1} parent=1 // pred_check_branch
      %21 = sbr.rel (0) target = $region13
    $region12: #{tpu_custom_call.1} parent=1 // pred_region
      _
    $region13: #{tpu_custom_call.1} parent=1 // pred_fallthru
      _
    // Predicated region
    $region14: #{tpu_custom_call.1} parent=1 // pred_check
      _
    $region15: #{tpu_custom_call.1} parent=1 // pred_check_branch
      %23 = sbr.rel (0) target = $region17
    $region16: #{tpu_custom_call.1} parent=1 // pred_region
      _
    $region17: #{tpu_custom_call.1} parent=1 // pred_fallthru
      _
    // Predicated region
    $region18: #{tpu_custom_call.1} parent=1 // pred_check
      _
    $region19: #{tpu_custom_call.1} parent=1 // pred_check_branch
      %25 = sbr.rel (0) target = $region21
    $region20: #{tpu_custom_call.1} parent=1 // pred_region
      _
    $region21: #{tpu_custom_call.1} parent=1 // pred_fallthru
      _
    // Predicated region
    $region22: #{tpu_custom_call.1} parent=1 // pred_check
      _
    $region23: #{tpu_custom_call.1} parent=1 // pred_check_branch
      %27 = sbr.rel (0) target = $region25
    $region24: #{tpu_custom_call.1} parent=1 // pred_region
      _
    $region25: #{tpu_custom_call.1} parent=1 // pred_fallthru
      _
    // Predicated region
    $region26: #{tpu_custom_call.1} parent=1 // pred_check
      _
    $region27: #{tpu_custom_call.1} parent=1 // pred_check_branch
      %29 = sbr.rel (0) target = $region29
    $region28: #{tpu_custom_call.1} parent=1 // pred_region
      _
    $region29: #{tpu_custom_call.1} parent=1 // pred_fallthru
      _
    %v30 = vld [vmem:[%s2] sm:$0x1]
    %v31 = vld [vmem:[%s0] sm:$0xff]
    %v33 = vlaneseq
    %v34 = vshrl.u32 %v33, 7
    %v35 = vsub.s32 0, %v34
    %v36 = vrot.slane %v30, %v35
    %v38 = vadd.f32 %v31, %v36
    %v39 = vld [vmem:[%s1] sm:$0xff]
    %v40 = vld [vmem:[%s1 + $0x8] sm:$0xff]
    %v41 = vld [vmem:[%s1 + $0x10] sm:$0xff]
    %v42 = vld [vmem:[%s1 + $0x18] sm:$0xff]
    %vm43 = vcmask 261120
    %v45 = vsel %vm43, %v38, 0
    %47 = vmatprep.subr.mxu0 0.0
    %48 = vmatpush1.msra.mxu0 %v39
    %49 = vmatprep.subr.mxu0 0.0
    %50 = vmatpush1.msra.mxu0 %v40
    %51 = vmatprep.subr.mxu0 0.0
    %52 = vmatpush1.msra.mxu0 %v41
    %53 = vmatprep.subr.mxu0 0.0
    %54 = vmatpush1.msra.mxu0 %v42
    %55 = vmatprep.subr.mxu0 0.0
    %56 = vmatpush1.msra.mxu0 0.0
    %57 = vmatprep.subr.mxu0 0.0
    %58 = vmatpush1.msra.mxu0 0.0
    %59 = vmatprep.subr.mxu0 0.0
    %60 = vmatpush1.msra.mxu0 0.0
    %61 = vmatprep.subr.mxu0 0.0
    %62 = vmatpush1.msra.mxu0 0.0
    %63 = vmatprep.subr.mxu0 0.0
    %64 = vmatpush1.msra.mxu0 0.0
    %65 = vmatprep.subr.mxu0 0.0
    %66 = vmatpush1.msra.mxu0 0.0
    %67 = vmatprep.subr.mxu0 0.0
    %68 = vmatpush1.msra.mxu0 0.0
    %69 = vmatprep.subr.mxu0 0.0
    %70 = vmatpush1.msra.mxu0 0.0
    %71 = vmatprep.subr.mxu0 0.0
    %72 = vmatpush1.msra.mxu0 0.0
    %73 = vmatprep.subr.mxu0 0.0
    %74 = vmatpush1.msra.mxu0 0.0
    %75 = vmatprep.subr.mxu0 0.0
    %76 = vmatpush1.msra.mxu0 0.0
    %77 = vmatprep.subr.mxu0 0.0
    %78 = vmatpush1.msra.mxu0 0.0
    %79 = vmatprep.subr.mxu0 0.0
    %80 = vmatpush1.msra.mxu0 0.0
    %81 = vmatprep.subr.mxu0 0.0
    %82 = vmatpush1.msra.mxu0 0.0
    %83 = vmatprep.subr.mxu0 0.0
    %84 = vmatpush1.msra.mxu0 0.0
    %85 = vmatprep.subr.mxu0 0.0
    %86 = vmatpush1.msra.mxu0 0.0
    %87 = vmatprep.subr.mxu0 0.0
    %88 = vmatpush1.msra.mxu0 0.0
    %89 = vmatprep.subr.mxu0 0.0
    %90 = vmatpush1.msra.mxu0 0.0
    %91 = vmatprep.subr.mxu0 0.0
    %92 = vmatpush1.msra.mxu0 0.0
    %93 = vmatprep.subr.mxu0 0.0
    %94 = vmatpush1.msra.mxu0 0.0
    %95 = vmatprep.subr.mxu0 0.0
    %96 = vmatpush1.msra.mxu0 0.0
    %97 = vmatprep.subr.mxu0 0.0
    %98 = vmatpush1.msra.mxu0 0.0
    %99 = vmatprep.subr.mxu0 0.0
    %100 = vmatpush1.msra.mxu0 0.0
    %101 = vmatprep.subr.mxu0 0.0
    %102 = vmatpush1.msra.mxu0 0.0
    %103 = vmatprep.subr.mxu0 0.0
    %104 = vmatpush1.msra.mxu0 0.0
    %105 = vmatprep.subr.mxu0 0.0
    %106 = vmatpush1.msra.mxu0 0.0
    %107 = vmatprep.subr.mxu0 0.0
    %108 = vmatpush1.msra.mxu0 0.0
    %109 = vmatprep.subr.mxu0 0.0
    %110 = vmatpush1.msra.mxu0 0.0
    %111 = vmatprep.mubr.f32.mxu0 0.0
    %112 = vmatmul.mubr.f32.gmra.mrb[0].mxu0 %v45
    %v113 = vpop.f32.mrb[0].mxu0
    %v114 = vadd.f32 0.0, %v113
    %v115 = vpop.f32.mrb[0].mxu0
    %116 = vdwg.mxu0
    %v117 = vsub.f32 %v114, %v36
    %118 = vst.msk [vmem:[#allocation2] sm:$0xff] %vm43, %v117
    %v119 = vld [vmem:[%s3] sm:$0xff]
    %v120 = vld [vmem:[%s3 + $0x8] sm:$0xff]
    %v121 = vld [vmem:[%s3 + $0x10] sm:$0xff]
    %v122 = vld [vmem:[%s3 + $0x18] sm:$0xff]
    %v123 = vld [vmem:[%s3 + $0x20] sm:$0xff]
    %v124 = vld [vmem:[%s3 + $0x28] sm:$0xff]
    %v125 = vld [vmem:[%s3 + $0x30] sm:$0xff]
    %v126 = vld [vmem:[%s3 + $0x38] sm:$0xff]
    %v127 = vld [vmem:[%s4] sm:$0x3]
    %v129 = vlaneseq
    %v130 = vshrl.u32 %v129, 7
    %v131 = vsub.s32 0, %v130
    %v132 = vrot.slane %v127, %v131
    %v133 = vlaneseq
    %v134 = vshrl.u32 %v133, 7
    %v135 = vsub.s32 1, %v134
    %v136 = vrot.slane %v127, %v135
    %v140 = vsel %vm43, %v117, 0
    %142 = vmatprep.subr.mxu0 %v120
    %143 = vmatpush1.msra.mxu0 %v119
    %144 = vmatprep.subr.mxu0 %v122
    %145 = vmatpush1.msra.mxu0 %v121
    %146 = vmatprep.subr.mxu0 %v124
    %147 = vmatpush1.msra.mxu0 %v123
    %148 = vmatprep.subr.mxu0 %v126
    %149 = vmatpush1.msra.mxu0 %v125
    %150 = vmatprep.subr.mxu0 0.0
    %151 = vmatpush1.msra.mxu0 0.0
    %152 = vmatprep.subr.mxu0 0.0
    %153 = vmatpush1.msra.mxu0 0.0
    %154 = vmatprep.subr.mxu0 0.0
    %155 = vmatpush1.msra.mxu0 0.0
    %156 = vmatprep.subr.mxu0 0.0
    %157 = vmatpush1.msra.mxu0 0.0
    %158 = vmatprep.subr.mxu0 0.0
    %159 = vmatpush1.msra.mxu0 0.0
    %160 = vmatprep.subr.mxu0 0.0
    %161 = vmatpush1.msra.mxu0 0.0
    %162 = vmatprep.subr.mxu0 0.0
    %163 = vmatpush1.msra.mxu0 0.0
    %164 = vmatprep.subr.mxu0 0.0
    %165 = vmatpush1.msra.mxu0 0.0
    %166 = vmatprep.subr.mxu0 0.0
    %167 = vmatpush1.msra.mxu0 0.0
    %168 = vmatprep.subr.mxu0 0.0
    %169 = vmatpush1.msra.mxu0 0.0
    %170 = vmatprep.subr.mxu0 0.0
    %171 = vmatpush1.msra.mxu0 0.0
    %172 = vmatprep.subr.mxu0 0.0
    %173 = vmatpush1.msra.mxu0 0.0
    %174 = vmatprep.subr.mxu0 0.0
    %175 = vmatpush1.msra.mxu0 0.0
    %176 = vmatprep.subr.mxu0 0.0
    %177 = vmatpush1.msra.mxu0 0.0
    %178 = vmatprep.subr.mxu0 0.0
    %179 = vmatpush1.msra.mxu0 0.0
    %180 = vmatprep.subr.mxu0 0.0
    %181 = vmatpush1.msra.mxu0 0.0
    %182 = vmatprep.subr.mxu0 0.0
    %183 = vmatpush1.msra.mxu0 0.0
    %184 = vmatprep.subr.mxu0 0.0
    %185 = vmatpush1.msra.mxu0 0.0
    %186 = vmatprep.subr.mxu0 0.0
    %187 = vmatpush1.msra.mxu0 0.0
    %188 = vmatprep.subr.mxu0 0.0
    %189 = vmatpush1.msra.mxu0 0.0
    %190 = vmatprep.subr.mxu0 0.0
    %191 = vmatpush1.msra.mxu0 0.0
    %192 = vmatprep.subr.mxu0 0.0
    %193 = vmatpush1.msra.mxu0 0.0
    %194 = vmatprep.subr.mxu0 0.0
    %195 = vmatpush1.msra.mxu0 0.0
    %196 = vmatprep.subr.mxu0 0.0
    %197 = vmatpush1.msra.mxu0 0.0
    %198 = vmatprep.subr.mxu0 0.0
    %199 = vmatpush1.msra.mxu0 0.0
    %200 = vmatprep.subr.mxu0 0.0
    %201 = vmatpush1.msra.mxu0 0.0
    %202 = vmatprep.subr.mxu0 0.0
    %203 = vmatpush1.msra.mxu0 0.0
    %204 = vmatprep.subr.mxu0 0.0
    %205 = vmatpush1.msra.mxu0 0.0
    %206 = vmatprep.mubr.f32.mxu0 0.0
    %207 = vmatmul.mubr.f32.gmra.mrb[0].mxu0 %v140
    %v208 = vpop.f32.mrb[0].mxu0
    %v209 = vadd.f32 %v132, %v208
    %v210 = vpop.f32.mrb[0].mxu0
    %v211 = vadd.f32 %v136, %v210
    %212 = vdwg.mxu0
    %v213 = vmul.f32 %v209, 0.01
    %v214 = vmul.f32 %v211, 0.01
    %v215 = vmax.f32 %v209, %v213
    %v216 = vmax.f32 %v211, %v214
    %v217 = vld [vmem:[%s5] sm:$0xff]
    %v218 = vld [vmem:[%s5 + $0x8] sm:$0xff]
    %v219 = vld [vmem:[%s5 + $0x10] sm:$0xff]
    %v220 = vld [vmem:[%s5 + $0x18] sm:$0xff]
    %v221 = vld [vmem:[%s5 + $0x20] sm:$0xff]
    %v222 = vld [vmem:[%s5 + $0x28] sm:$0xff]
    %v223 = vld [vmem:[%s5 + $0x30] sm:$0xff]
    %v224 = vld [vmem:[%s5 + $0x38] sm:$0xff]
    %v225 = vld [vmem:[%s5 + $0x40] sm:$0xff]
    %v226 = vld [vmem:[%s5 + $0x48] sm:$0xff]
    %v227 = vld [vmem:[%s5 + $0x50] sm:$0xff]
    %v228 = vld [vmem:[%s5 + $0x58] sm:$0xff]
    %v229 = vld [vmem:[%s5 + $0x60] sm:$0xff]
    %v230 = vld [vmem:[%s5 + $0x68] sm:$0xff]
    %v231 = vld [vmem:[%s5 + $0x70] sm:$0xff]
    %v232 = vld [vmem:[%s5 + $0x78] sm:$0xff]
    %v233 = vld [vmem:[%s5 + $0x80] sm:$0xff]
    %v234 = vld [vmem:[%s5 + $0x88] sm:$0xff]
    %v235 = vld [vmem:[%s5 + $0x90] sm:$0xff]
    %v236 = vld [vmem:[%s5 + $0x98] sm:$0xff]
    %v237 = vld [vmem:[%s5 + $0xa0] sm:$0xff]
    %v238 = vld [vmem:[%s5 + $0xa8] sm:$0xff]
    %v239 = vld [vmem:[%s5 + $0xb0] sm:$0xff]
    %v240 = vld [vmem:[%s5 + $0xb8] sm:$0xff]
    %v241 = vld [vmem:[%s5 + $0xc0] sm:$0xff]
    %v242 = vld [vmem:[%s5 + $0xc8] sm:$0xff]
    %v243 = vld [vmem:[%s5 + $0xd0] sm:$0xff]
    %v244 = vld [vmem:[%s5 + $0xd8] sm:$0xff]
    %v245 = vld [vmem:[%s5 + $0xe0] sm:$0xff]
    %v246 = vld [vmem:[%s5 + $0xe8] sm:$0xff]
    %v247 = vld [vmem:[%s5 + $0xf0] sm:$0xff]
    %v248 = vld [vmem:[%s5 + $0xf8] sm:$0xff]
    %v249 = vld [vmem:[%s6] sm:$0x1]
    %v251 = vlaneseq
    %v252 = vshrl.u32 %v251, 7
    %v253 = vsub.s32 0, %v252
    %v254 = vrot.slane %v249, %v253
    %256 = vmatprep.subr.mxu0 0.0
    %257 = vmatpush1.msra.mxu0 %v217
    %258 = vmatprep.subr.mxu0 0.0
    %259 = vmatpush1.msra.mxu0 %v218
    %260 = vmatprep.subr.mxu0 0.0
    %261 = vmatpush1.msra.mxu0 %v219
    %262 = vmatprep.subr.mxu0 0.0
    %263 = vmatpush1.msra.mxu0 %v220
    %264 = vmatprep.subr.mxu0 0.0
    %265 = vmatpush1.msra.mxu0 %v221
    %266 = vmatprep.subr.mxu0 0.0
    %267 = vmatpush1.msra.mxu0 %v222
    %268 = vmatprep.subr.mxu0 0.0
    %269 = vmatpush1.msra.mxu0 %v223
    %270 = vmatprep.subr.mxu0 0.0
    %271 = vmatpush1.msra.mxu0 %v224
    %272 = vmatprep.subr.mxu0 0.0
    %273 = vmatpush1.msra.mxu0 %v225
    %274 = vmatprep.subr.mxu0 0.0
    %275 = vmatpush1.msra.mxu0 %v226
    %276 = vmatprep.subr.mxu0 0.0
    %277 = vmatpush1.msra.mxu0 %v227
    %278 = vmatprep.subr.mxu0 0.0
    %279 = vmatpush1.msra.mxu0 %v228
    %280 = vmatprep.subr.mxu0 0.0
    %281 = vmatpush1.msra.mxu0 %v229
    %282 = vmatprep.subr.mxu0 0.0
    %283 = vmatpush1.msra.mxu0 %v230
    %284 = vmatprep.subr.mxu0 0.0
    %285 = vmatpush1.msra.mxu0 %v231
    %286 = vmatprep.subr.mxu0 0.0
    %287 = vmatpush1.msra.mxu0 %v232
    %288 = vmatprep.subr.mxu0 0.0
    %289 = vmatpush1.msra.mxu0 %v233
    %290 = vmatprep.subr.mxu0 0.0
    %291 = vmatpush1.msra.mxu0 %v234
    %292 = vmatprep.subr.mxu0 0.0
    %293 = vmatpush1.msra.mxu0 %v235
    %294 = vmatprep.subr.mxu0 0.0
    %295 = vmatpush1.msra.mxu0 %v236
    %296 = vmatprep.subr.mxu0 0.0
    %297 = vmatpush1.msra.mxu0 %v237
    %298 = vmatprep.subr.mxu0 0.0
    %299 = vmatpush1.msra.mxu0 %v238
    %300 = vmatprep.subr.mxu0 0.0
    %301 = vmatpush1.msra.mxu0 %v239
    %302 = vmatprep.subr.mxu0 0.0
    %303 = vmatpush1.msra.mxu0 %v240
    %304 = vmatprep.subr.mxu0 0.0
    %305 = vmatpush1.msra.mxu0 %v241
    %306 = vmatprep.subr.mxu0 0.0
    %307 = vmatpush1.msra.mxu0 %v242
    %308 = vmatprep.subr.mxu0 0.0
    %309 = vmatpush1.msra.mxu0 %v243
    %310 = vmatprep.subr.mxu0 0.0
    %311 = vmatpush1.msra.mxu0 %v244
    %312 = vmatprep.subr.mxu0 0.0
    %313 = vmatpush1.msra.mxu0 %v245
    %314 = vmatprep.subr.mxu0 0.0
    %315 = vmatpush1.msra.mxu0 %v246
    %316 = vmatprep.subr.mxu0 0.0
    %317 = vmatpush1.msra.mxu0 %v247
    %318 = vmatprep.subr.mxu0 0.0
    %319 = vmatpush1.msra.mxu0 %v248
    %320 = vmatprep.mubr.f32.mxu0 %v216
    %321 = vmatmul.mubr.f32.gmra.mrb[0].mxu0 %v215
    %v322 = vpop.f32.mrb[0].mxu0
    %v323 = vadd.f32 %v254, %v322
    %v324 = vpop.f32.mrb[0].mxu0
    %325 = vdwg.mxu0
    %326 = vst.msk [vmem:[#allocation4] sm:$0xff] %vm43, %v323
    // Predicated region
    $region30: #{tpu_custom_call.1} parent=1 // pred_check
      _
    $region31: #{tpu_custom_call.1} parent=1 // pred_check_branch
      %328 = sbr.rel (0) target = $region33
    $region32: #{tpu_custom_call.1} parent=1 // pred_region
      %s330 = ssub.s32 128, 128
      %331 = vsyncadd [#allocation3], %s330
      %s333 = sshll.u32 [#allocation2], 4
      %s334 = int_to_ptr.vmem [resolvable:$true] %s333
      %336 = dma.vmem_to_hbm [thread:$0]  %s334, 128, %s7, [#allocation3]
    $region33: #{tpu_custom_call.1} parent=1 // pred_fallthru
      _
    // Predicated region
    $region34: #{tpu_custom_call.1} parent=1 // pred_check
      _
    $region35: #{tpu_custom_call.1} parent=1 // pred_check_branch
      %338 = sbr.rel (0) target = $region37
    $region36: #{tpu_custom_call.1} parent=1 // pred_region
      %s340 = ssub.s32 128, 128
      %341 = vsyncadd [#allocation5], %s340
      %s343 = sshll.u32 [#allocation4], 4
      %s344 = int_to_ptr.vmem [resolvable:$true] %s343
      %346 = dma.vmem_to_hbm [thread:$0]  %s344, 128, %s8, [#allocation5]
    $region37: #{tpu_custom_call.1} parent=1 // pred_fallthru
      _
    // Predicated region
    $region38: #{tpu_custom_call.1} parent=1 // pred_check
      _
    $region39: #{tpu_custom_call.1} parent=1 // pred_check_branch
      %348 = sbr.rel (0) target = $region41
    $region40: #{tpu_custom_call.1} parent=1 // pred_region
      %349 = dma.done [#allocation3], 128
    $region41: #{tpu_custom_call.1} parent=1 // pred_fallthru
      _
    // Predicated region
    $region42: #{tpu_custom_call.1} parent=1 // pred_check
      _
    $region43: #{tpu_custom_call.1} parent=1 // pred_check_branch
      %351 = sbr.rel (0) target = $region45
    $region44: #{tpu_custom_call.1} parent=1 // pred_region
      %352 = dma.done [#allocation5], 128
    $region45: #{tpu_custom_call.1} parent=1 // pred_fallthru
      _
    %353 = vsyncpa [#allocation3], 1
    %354 = vsyncpa [#allocation5], 1

</llo_original>
